<compile_context>
chip_gen: v5e
topology: v5e:2x2
jax: 0.10.0
libtpu: 0.0.40
codegen_flags: <defaults>
</compile_context>

<pallas_src>
import jax
import jax.numpy as jnp
from jax.experimental import pallas as pl
from jax.experimental.pallas import tpu as pltpu

# ---------------- config (mirrors cfg.* in the original module) ----------------
DIM_IN       = 16            # cfg.share.dim_in
DIM_EMB      = 32            # dim_emb
DIM_PE       = 8             # pecfg.dim_pe
NUM_RW_STEPS = 8             # len(pecfg.kernel.times)
HIDDEN       = 2 * DIM_PE    # MLP hidden width (n_layers = 2)
DIM_H        = DIM_EMB - DIM_PE
BN_EPS       = 1e-5


def _encoder_kernel(p_ref, x_ref,
                    w1_ref, b1_ref,
                    w2_ref, b2_ref,
                    wx_ref, bx_ref,
                    out_ref):
    """Per node-tile kernel, channel-major layout: every ref is (channels, tile_n).

    BatchNorm is already folded into (w1, b1) by the wrapper, so each node tile
    is fully independent -> the node axis is a "parallel" grid dimension.
    """
    p = p_ref[...]                                                   # (T, tn) f32

    # --- pe_encoder: Linear -> ReLU -> Linear -> ReLU (MLP, n_layers=2) ---
    h1 = jnp.dot(w1_ref[...], p, preferred_element_type=jnp.float32) + b1_ref[...]
    h1 = jnp.maximum(h1, 0.0)                                        # (HIDDEN, tn)
    pe = jnp.dot(w2_ref[...], h1, preferred_element_type=jnp.float32) + b2_ref[...]
    pe = jnp.maximum(pe, 0.0)                                        # (DIM_PE, tn)

    # --- expand_x: linear_x projection of node features ---
    h = jnp.dot(wx_ref[...], x_ref[...],
                preferred_element_type=jnp.float32) + bx_ref[...]    # (DIM_H, tn)

    # --- "concat" along the channel (sublane) axis via two aligned slice stores ---
    out_ref[:DIM_H, :] = h.astype(out_ref.dtype)
    out_ref[DIM_H:, :] = pe.astype(out_ref.dtype)


def kernel_pe_node_encoder(pestat, x, params, *, tile_n=512):
    """Wrapper. pestat: (N, num_rw_steps), x: (N, dim_in) -> (N, dim_emb)."""
    assert tile_n % 128 == 0, "node tile must be a multiple of the 128-lane width"
    n = pestat.shape[0]

    # ---- raw_norm: BatchNorm1d with training-mode FULL-batch statistics,
    #      folded into the first pe_encoder Linear (exactly equivalent algebra):
    #      BN(p) = p*s + t  with  s = gamma*rsqrt(var+eps), t = beta - mean*s
    #      W1 @ BN(p) + b1 = (W1*s) @ p + (W1@t + b1)
    p32 = pestat.astype(jnp.float32)
    mean = jnp.mean(p32, axis=0)
    var = jnp.mean((p32 - mean[None, :]) ** 2, axis=0)          # biased, as PyTorch
    s = params["bn_gamma"] * jax.lax.rsqrt(var + BN_EPS)        # (T,)
    t = params["bn_beta"] - mean * s                            # (T,)
    w1f = params["w1"] * s[None, :]                             # (HIDDEN, T)
    b1f = params["w1"] @ t + params["b1"]                       # (HIDDEN,)

    # ---- channel-major layout: nodes on the lane axis, padded to the tile width.
    n_pad = pl.cdiv(n, tile_n) * tile_n
    p_t = jnp.zeros((NUM_RW_STEPS, n_pad), jnp.float32).at[:, :n].set(p32.T)
    x_t = jnp.zeros((DIM_IN, n_pad), jnp.float32).at[:, :n].set(
        x.astype(jnp.float32).T)

    def data_spec(c):                         # node-tiled inputs
        return pl.BlockSpec((c, tile_n), lambda i: (0, i))

    def pinned(shape):                        # replicated params: DMA'd once
        return pl.BlockSpec(shape, lambda i: (0, 0))

    flops = 2 * n_pad * (HIDDEN * NUM_RW_STEPS + DIM_PE * HIDDEN + DIM_H * DIM_IN)
    bytes_accessed = 4 * n_pad * (NUM_RW_STEPS + DIM_IN + DIM_EMB)

    out_t = pl.pallas_call(
        _encoder_kernel,
        out_shape=jax.ShapeDtypeStruct((DIM_EMB, n_pad), jnp.float32),
        grid=(n_pad // tile_n,),
        in_specs=[
            data_spec(NUM_RW_STEPS),
            data_spec(DIM_IN),
            pinned((HIDDEN, NUM_RW_STEPS)), pinned((HIDDEN, 1)),
            pinned((DIM_PE, HIDDEN)),       pinned((DIM_PE, 1)),
            pinned((DIM_H, DIM_IN)),        pinned((DIM_H, 1)),
        ],
        out_specs=pl.BlockSpec((DIM_EMB, tile_n), lambda i: (0, i)),
        compiler_params=pltpu.CompilerParams(
            dimension_semantics=("parallel",)),        # megacore-shard node tiles
        cost_estimate=pl.CostEstimate(flops=flops, transcendentals=0,
                                      bytes_accessed=bytes_accessed),
    )(p_t, x_t,
      w1f, b1f.reshape(HIDDEN, 1),
      params["w2"], params["b2"].reshape(DIM_PE, 1),
      params["wx"], params["bx"].reshape(DIM_H, 1))

    # Back to node-major (N, dim_emb); padded columns dropped (layout plumbing).
    return out_t.T[:n]


def _reference(pestat, x, params):
    """Pure-JAX reference reproducing the PyTorch forward (node-major layout)."""
    p = pestat.astype(jnp.float32)
    mean = jnp.mean(p, axis=0, keepdims=True)
    var = jnp.mean((p - mean) ** 2, axis=0, keepdims=True)
    p = (p - mean) / jnp.sqrt(var + BN_EPS)
    p = p * params["bn_gamma"][None, :] + params["bn_beta"][None, :]
    h1 = jnp.maximum(p @ params["w1"].T + params["b1"][None, :], 0.0)
    pe = jnp.maximum(h1 @ params["w2"].T + params["b2"][None, :], 0.0)
    h = x @ params["wx"].T + params["bx"][None, :]
    return jnp.concatenate([h, pe], axis=1)


def _init_params(key):
    ks = jax.random.split(key, 6)
    scale = 0.1
    return {
        # BatchNorm1d affine params (PyTorch default init: gamma=1, beta=0)
        "bn_gamma": jnp.ones((NUM_RW_STEPS,), jnp.float32),
        "bn_beta": jnp.zeros((NUM_RW_STEPS,), jnp.float32),
        # pe_encoder MLP weights stored (out, in), as in PyTorch nn.Linear
        "w1": scale * jax.random.normal(ks[0], (HIDDEN, NUM_RW_STEPS), jnp.float32),
        "b1": scale * jax.random.normal(ks[1], (HIDDEN,), jnp.float32),
        "w2": scale * jax.random.normal(ks[2], (DIM_PE, HIDDEN), jnp.float32),
        "b2": scale * jax.random.normal(ks[3], (DIM_PE,), jnp.float32),
        # linear_x weights
        "wx": scale * jax.random.normal(ks[4], (DIM_H, DIM_IN), jnp.float32),
        "bx": scale * jax.random.normal(ks[5], (DIM_H,), jnp.float32),
    }


if __name__ == "__main__":
    key = jax.random.PRNGKey(0)
    k_pe, k_x, k_par = jax.random.split(key, 3)

    N = 300   # node count: not a tile multiple, exercises padding + a 3-step grid
    pestat = jax.random.normal(k_pe, (N, NUM_RW_STEPS), jnp.float32)  # pestat_<kernel>
    x = jax.random.normal(k_x, (N, DIM_IN), jnp.float32)              # batch.x
    params = _init_params(k_par)

    out = kernel_pe_node_encoder(pestat, x, params, tile_n=128)
    out = jax.block_until_ready(out)

    ref = _reference(pestat, x, params)
    assert out.shape == (N, DIM_EMB)
    assert jnp.allclose(out, ref, atol=2e-4, rtol=2e-4), "mismatch vs pure-JAX reference"

    print("KERNEL_OK")
</pallas_src>

<mosaic_0001>
module attributes {stable_mosaic.version = 11 : i64} {
  func.func @_encoder_kernel(%arg0: i32, %arg1: memref<8x128xf32, #tpu.memory_space<vmem>>, %arg2: memref<16x128xf32, #tpu.memory_space<vmem>>, %arg3: memref<16x8xf32, #tpu.memory_space<vmem>>, %arg4: memref<16x1xf32, #tpu.memory_space<vmem>>, %arg5: memref<8x16xf32, #tpu.memory_space<vmem>>, %arg6: memref<8x1xf32, #tpu.memory_space<vmem>>, %arg7: memref<24x16xf32, #tpu.memory_space<vmem>>, %arg8: memref<24x1xf32, #tpu.memory_space<vmem>>, %arg9: memref<32x128xf32, #tpu.memory_space<vmem>>) attributes {dimension_semantics = [#tpu.dimension_semantics<parallel>], iteration_bounds = array<i64: 3>, scalar_prefetch = 0 : i64, scratch_operands = 0 : i64, tpu.core_type = #tpu.core_type<tc>, window_params = [{transform_indices = @transform_0, window_bounds = array<i64: 8, 128>}, {transform_indices = @transform_1, window_bounds = array<i64: 16, 128>}, {pipeline_mode = #tpu.pipeline_mode<synchronous>, transform_indices = @transform_2, window_bounds = array<i64: 16, 8>}, {pipeline_mode = #tpu.pipeline_mode<synchronous>, transform_indices = @transform_3, window_bounds = array<i64: 16, 1>}, {pipeline_mode = #tpu.pipeline_mode<synchronous>, transform_indices = @transform_4, window_bounds = array<i64: 8, 16>}, {pipeline_mode = #tpu.pipeline_mode<synchronous>, transform_indices = @transform_5, window_bounds = array<i64: 8, 1>}, {pipeline_mode = #tpu.pipeline_mode<synchronous>, transform_indices = @transform_6, window_bounds = array<i64: 24, 16>}, {pipeline_mode = #tpu.pipeline_mode<synchronous>, transform_indices = @transform_7, window_bounds = array<i64: 24, 1>}, {transform_indices = @transform_8, window_bounds = array<i64: 32, 128>}]} {
    %c0 = arith.constant 0 : index
    %c0_0 = arith.constant 0 : index
    %0 = vector.load %arg1[%c0, %c0_0] : memref<8x128xf32, #tpu.memory_space<vmem>>, vector<8x128xf32>
    %c0_1 = arith.constant 0 : index
    %c0_2 = arith.constant 0 : index
    %1 = vector.load %arg3[%c0_1, %c0_2] : memref<16x8xf32, #tpu.memory_space<vmem>>, vector<16x8xf32>
    %cst = arith.constant dense<0.000000e+00> : vector<16x128xf32>
    %2 = tpu.matmul %1, %0, %cst {dimension_numbers = #tpu.dot_dimension_numbers<[1], [0], [0], [1], [0, 0, 1, 1], [], []>} : vector<16x8xf32>, vector<8x128xf32>, vector<16x128xf32> -> vector<16x128xf32>
    %c0_3 = arith.constant 0 : index
    %c0_4 = arith.constant 0 : index
    %3 = vector.load %arg4[%c0_3, %c0_4] : memref<16x1xf32, #tpu.memory_space<vmem>>, vector<16x1xf32>
    %4 = vector.broadcast %3 : vector<16x1xf32> to vector<16x128xf32>
    %5 = arith.addf %2, %4 : vector<16x128xf32>
    %cst_5 = arith.constant 0.000000e+00 : f32
    %6 = vector.broadcast %cst_5 : f32 to vector<16x128xf32>
    %7 = arith.maximumf %5, %6 : vector<16x128xf32>
    %c0_6 = arith.constant 0 : index
    %c0_7 = arith.constant 0 : index
    %8 = vector.load %arg5[%c0_6, %c0_7] : memref<8x16xf32, #tpu.memory_space<vmem>>, vector<8x16xf32>
    %cst_8 = arith.constant dense<0.000000e+00> : vector<8x128xf32>
    %9 = tpu.matmul %8, %7, %cst_8 {dimension_numbers = #tpu.dot_dimension_numbers<[1], [0], [0], [1], [0, 0, 1, 1], [], []>} : vector<8x16xf32>, vector<16x128xf32>, vector<8x128xf32> -> vector<8x128xf32>
    %c0_9 = arith.constant 0 : index
    %c0_10 = arith.constant 0 : index
    %10 = vector.load %arg6[%c0_9, %c0_10] : memref<8x1xf32, #tpu.memory_space<vmem>>, vector<8x1xf32>
    %11 = vector.broadcast %10 : vector<8x1xf32> to vector<8x128xf32>
    %12 = arith.addf %9, %11 : vector<8x128xf32>
    %cst_11 = arith.constant 0.000000e+00 : f32
    %13 = vector.broadcast %cst_11 : f32 to vector<8x128xf32>
    %14 = arith.maximumf %12, %13 : vector<8x128xf32>
    %c0_12 = arith.constant 0 : index
    %c0_13 = arith.constant 0 : index
    %15 = vector.load %arg7[%c0_12, %c0_13] : memref<24x16xf32, #tpu.memory_space<vmem>>, vector<24x16xf32>
    %c0_14 = arith.constant 0 : index
    %c0_15 = arith.constant 0 : index
    %16 = vector.load %arg2[%c0_14, %c0_15] : memref<16x128xf32, #tpu.memory_space<vmem>>, vector<16x128xf32>
    %cst_16 = arith.constant dense<0.000000e+00> : vector<24x128xf32>
    %17 = tpu.matmul %15, %16, %cst_16 {dimension_numbers = #tpu.dot_dimension_numbers<[1], [0], [0], [1], [0, 0, 1, 1], [], []>} : vector<24x16xf32>, vector<16x128xf32>, vector<24x128xf32> -> vector<24x128xf32>
    %c0_17 = arith.constant 0 : index
    %c0_18 = arith.constant 0 : index
    %18 = vector.load %arg8[%c0_17, %c0_18] : memref<24x1xf32, #tpu.memory_space<vmem>>, vector<24x1xf32>
    %19 = vector.broadcast %18 : vector<24x1xf32> to vector<24x128xf32>
    %20 = arith.addf %17, %19 : vector<24x128xf32>
    %c0_19 = arith.constant 0 : index
    %c0_20 = arith.constant 0 : index
    %21 = vector.load %arg9[%c0_19, %c0_20] : memref<32x128xf32, #tpu.memory_space<vmem>>, vector<24x128xf32>
    tpu.vector_store %arg9[%c0_19, %c0_20], %20 {strides = array<i32>} : memref<32x128xf32, #tpu.memory_space<vmem>>, vector<24x128xf32>,
    %c24 = arith.constant 24 : index
    %c0_21 = arith.constant 0 : index
    %22 = vector.load %arg9[%c24, %c0_21] : memref<32x128xf32, #tpu.memory_space<vmem>>, vector<8x128xf32>
    tpu.vector_store %arg9[%c24, %c0_21], %14 {strides = array<i32>} : memref<32x128xf32, #tpu.memory_space<vmem>>, vector<8x128xf32>,
    return
  }
  func.func @transform_0(%arg0: i32) -> (i32, i32) {
    %c0_i32 = arith.constant 0 : i32
    %c0_i32_0 = arith.constant 0 : i32
    return %c0_i32, %arg0 : i32, i32
  }
  func.func @transform_1(%arg0: i32) -> (i32, i32) {
    %c0_i32 = arith.constant 0 : i32
    %c0_i32_0 = arith.constant 0 : i32
    return %c0_i32, %arg0 : i32, i32
  }
  func.func @transform_2(%arg0: i32) -> (i32, i32) {
    %c0_i32 = arith.constant 0 : i32
    %c0_i32_0 = arith.constant 0 : i32
    %c0_i32_1 = arith.constant 0 : i32
    return %c0_i32, %c0_i32_0 : i32, i32
  }
  func.func @transform_3(%arg0: i32) -> (i32, i32) {
    %c0_i32 = arith.constant 0 : i32
    %c0_i32_0 = arith.constant 0 : i32
    %c0_i32_1 = arith.constant 0 : i32
    return %c0_i32, %c0_i32_0 : i32, i32
  }
  func.func @transform_4(%arg0: i32) -> (i32, i32) {
    %c0_i32 = arith.constant 0 : i32
    %c0_i32_0 = arith.constant 0 : i32
    %c0_i32_1 = arith.constant 0 : i32
    return %c0_i32, %c0_i32_0 : i32, i32
  }
  func.func @transform_5(%arg0: i32) -> (i32, i32) {
    %c0_i32 = arith.constant 0 : i32
    %c0_i32_0 = arith.constant 0 : i32
    %c0_i32_1 = arith.constant 0 : i32
    return %c0_i32, %c0_i32_0 : i32, i32
  }
  func.func @transform_6(%arg0: i32) -> (i32, i32) {
    %c0_i32 = arith.constant 0 : i32
    %c0_i32_0 = arith.constant 0 : i32
    %c0_i32_1 = arith.constant 0 : i32
    return %c0_i32, %c0_i32_0 : i32, i32
  }
  func.func @transform_7(%arg0: i32) -> (i32, i32) {
    %c0_i32 = arith.constant 0 : i32
    %c0_i32_0 = arith.constant 0 : i32
    %c0_i32_1 = arith.constant 0 : i32
    return %c0_i32, %c0_i32_0 : i32, i32
  }
  func.func @transform_8(%arg0: i32) -> (i32, i32) {
    %c0_i32 = arith.constant 0 : i32
    %c0_i32_0 = arith.constant 0 : i32
    return %c0_i32, %arg0 : i32, i32
  }
}

</mosaic_0001>

<llo_original>
// kernel: tpu_custom_call.1
$region0: #{tpu_custom_call.1}
  #allocation0 [shape = 'u32[]', space=smem, size = 0x4, offset = 0x4, fixed_abs, tag = 'smem constant byte address 0x4 - core index']
  #allocation1 [shape = 'u32[72,128]{1,0:T(1,128)}', space=vmem, size = 0x9000, scoped, tag = 'internal scratch']
  %s0 = inlined_call_operand.vmem [shape: f32[8,384], index: 0, kind: input, shape index: {}]
  %s1 = inlined_call_operand.vmem [shape: f32[16,384], index: 1, kind: input, shape index: {}]
  %s2 = inlined_call_operand.vmem [shape: f32[16,8], index: 2, kind: input, shape index: {}]
  %s3 = inlined_call_operand.vmem [shape: f32[16,1], index: 3, kind: input, shape index: {}]
  %s4 = inlined_call_operand.vmem [shape: f32[8,16], index: 4, kind: input, shape index: {}]
  %s5 = inlined_call_operand.vmem [shape: f32[8,1], index: 5, kind: input, shape index: {}]
  %s6 = inlined_call_operand.vmem [shape: f32[24,16], index: 6, kind: input, shape index: {}]
  %s7 = inlined_call_operand.vmem [shape: f32[24,1], index: 7, kind: input, shape index: {}]
  %s8 = inlined_call_operand.hbm [shape: f32[32,384], index: 8, kind: output, shape index: {}]
  %s9 = sld [smem:[#allocation0]]
  $region103: #{tpu_custom_call.1} parent=0
    _
  %s11 = ssub.s32 1, %s9
  %s12 = scalar_select 0, %s11, %s9
  $region1: #{tpu_custom_call.1} parent=0
    #allocation2 [shape = 'u8[16384]{0}', space=vmem, size = 0x4000, scoped, tag = 'input window, operand 1']
    #allocation3 [shape = 'u8[32768]{0}', space=vmem, size = 0x8000, scoped, tag = 'output window, operand 0']
    #allocation4 [shape = 's32[2]{0}', space=sflag, size = 0x8, scoped, tag = 'scoped memory for tpu_custom_call.1']
    %13 = vsyncpa [#allocation4], 0
    %s14 = scalar_lea.sflag [#allocation4], 1
    %15 = vsyncpa %s14, 0
    loop: start=0, step=1, limit=5
    $region2: #{tpu_custom_call.1} parent=1 // loop_pre_header
      _
    $region3: #{tpu_custom_call.1} parent=1 // loop_header
      %s17 = sphi 0, %s21
      %p18 = scmp.ge.s32.totalorder %s17, 5
      %s27 = sphi 0, %s29
      %s30 = sphi 0, %s27
      %s31 = sphi 0, %s30
      %s47 = sphi 0, %s31
      %s53 = sphi 0, %s55
      %s56 = sphi 0, %s53
      %s57 = sphi 0, %s56
      %s73 = sphi 0, %s57
      %s77 = sphi 0, %s77
      %s79 = sphi 0, %s77
      %s80 = sphi 0, %s79
      %s94 = sphi 0, %s80
      %s98 = sphi 0, %s98
      %s100 = sphi 0, %s98
      %s101 = sphi 0, %s100
      %s115 = sphi 0, %s101
      %s119 = sphi 0, %s119
      %s121 = sphi 0, %s119
      %s122 = sphi 0, %s121
      %s136 = sphi 0, %s122
      %s140 = sphi 0, %s140
      %s142 = sphi 0, %s140
      %s143 = sphi 0, %s142
      %s157 = sphi 0, %s143
      %s161 = sphi 0, %s161
      %s163 = sphi 0, %s161
      %s164 = sphi 0, %s163
      %s178 = sphi 0, %s164
      %s182 = sphi 0, %s182
      %s184 = sphi 0, %s182
      %s185 = sphi 0, %s184
      %s199 = sphi 0, %s185
      %s205 = sphi 0, %s207
      %s208 = sphi 0, %s205
      %s209 = sphi 0, %s208
      %s225 = sphi 0, %s209
    $region4: #{tpu_custom_call.1} parent=1 // loop_header_branch
      %20 = sbr.rel (%p18) target = $region8
    $region5: #{tpu_custom_call.1} parent=1 // loop_body
      %s22 = ssub.s32 %s17, 1
      %s23 = ssub.s32 %s17, 2
      %s24 = sadd.s32 %s17, 1
      %s25 = ssub.s32 %s17, %s24
      %p26 = scmp.eq.s32.totalorder %s25, 0
      %s28 = sadd.s32 %s27, 1
      %s29 = scalar_select %p26, %s27, %s28
      %p32 = pneg %p26
      %p33 = scmp.eq.s32.totalorder %s17, 2
      %p34 = por %p32, %p33
      %p35 = scmp.ne.s32.totalorder %s27, %s30
      %p36 = scmp.eq.s32.totalorder %s17, 0
      %p37 = por %p35, %p36
      %p38 = scmp.ne.s32.totalorder %s27, %s30
      %p39 = scmp.eq.s32.totalorder %s22, 2
      %p40 = por %p38, %p39
      %p41 = scmp.ne.s32.totalorder %s30, %s31
      %p42 = scmp.eq.s32.totalorder %s22, 0
      %p43 = por %p41, %p42
      %p44 = scmp.ne.s32.totalorder %s30, %s31
      %p45 = scmp.eq.s32.totalorder %s23, 2
      %p46 = por %p44, %p45
      %p48 = scmp.ne.s32.totalorder %s31, %s47
      %p49 = scmp.eq.s32.totalorder %s23, 0
      %p50 = por %p48, %p49
      %s51 = ssub.s32 %s17, %s24
      %p52 = scmp.eq.s32.totalorder %s51, 0
      %s54 = sadd.s32 %s53, 1
      %s55 = scalar_select %p52, %s53, %s54
      %p58 = pneg %p52
      %p59 = scmp.eq.s32.totalorder %s17, 2
      %p60 = por %p58, %p59
      %p61 = scmp.ne.s32.totalorder %s53, %s56
      %p62 = scmp.eq.s32.totalorder %s17, 0
      %p63 = por %p61, %p62
      %p64 = scmp.ne.s32.totalorder %s53, %s56
      %p65 = scmp.eq.s32.totalorder %s22, 2
      %p66 = por %p64, %p65
      %p67 = scmp.ne.s32.totalorder %s56, %s57
      %p68 = scmp.eq.s32.totalorder %s22, 0
      %p69 = por %p67, %p68
      %p70 = scmp.ne.s32.totalorder %s56, %s57
      %p71 = scmp.eq.s32.totalorder %s23, 2
      %p72 = por %p70, %p71
      %p74 = scmp.ne.s32.totalorder %s57, %s73
      %p75 = scmp.eq.s32.totalorder %s23, 0
      %p76 = por %p74, %p75
      %s78 = sadd.s32 %s77, 1
      %p81 = scmp.eq.s32.totalorder %s17, 2
      %p82 = scmp.ne.s32.totalorder %s77, %s79
      %p83 = scmp.eq.s32.totalorder %s17, 0
      %p84 = por %p82, %p83
      %p85 = scmp.ne.s32.totalorder %s77, %s79
      %p86 = scmp.eq.s32.totalorder %s22, 2
      %p87 = por %p85, %p86
      %p88 = scmp.ne.s32.totalorder %s79, %s80
      %p89 = scmp.eq.s32.totalorder %s22, 0
      %p90 = por %p88, %p89
      %p91 = scmp.ne.s32.totalorder %s79, %s80
      %p92 = scmp.eq.s32.totalorder %s23, 2
      %p93 = por %p91, %p92
      %p95 = scmp.ne.s32.totalorder %s80, %s94
      %p96 = scmp.eq.s32.totalorder %s23, 0
      %p97 = por %p95, %p96
      %s99 = sadd.s32 %s98, 1
      %p102 = scmp.eq.s32.totalorder %s17, 2
      %p103 = scmp.ne.s32.totalorder %s98, %s100
      %p104 = scmp.eq.s32.totalorder %s17, 0
      %p105 = por %p103, %p104
      %p106 = scmp.ne.s32.totalorder %s98, %s100
      %p107 = scmp.eq.s32.totalorder %s22, 2
      %p108 = por %p106, %p107
      %p109 = scmp.ne.s32.totalorder %s100, %s101
      %p110 = scmp.eq.s32.totalorder %s22, 0
      %p111 = por %p109, %p110
      %p112 = scmp.ne.s32.totalorder %s100, %s101
      %p113 = scmp.eq.s32.totalorder %s23, 2
      %p114 = por %p112, %p113
      %p116 = scmp.ne.s32.totalorder %s101, %s115
      %p117 = scmp.eq.s32.totalorder %s23, 0
      %p118 = por %p116, %p117
      %s120 = sadd.s32 %s119, 1
      %p123 = scmp.eq.s32.totalorder %s17, 2
      %p124 = scmp.ne.s32.totalorder %s119, %s121
      %p125 = scmp.eq.s32.totalorder %s17, 0
      %p126 = por %p124, %p125
      %p127 = scmp.ne.s32.totalorder %s119, %s121
      %p128 = scmp.eq.s32.totalorder %s22, 2
      %p129 = por %p127, %p128
      %p130 = scmp.ne.s32.totalorder %s121, %s122
      %p131 = scmp.eq.s32.totalorder %s22, 0
      %p132 = por %p130, %p131
      %p133 = scmp.ne.s32.totalorder %s121, %s122
      %p134 = scmp.eq.s32.totalorder %s23, 2
      %p135 = por %p133, %p134
      %p137 = scmp.ne.s32.totalorder %s122, %s136
      %p138 = scmp.eq.s32.totalorder %s23, 0
      %p139 = por %p137, %p138
      %s141 = sadd.s32 %s140, 1
      %p144 = scmp.eq.s32.totalorder %s17, 2
      %p145 = scmp.ne.s32.totalorder %s140, %s142
      %p146 = scmp.eq.s32.totalorder %s17, 0
      %p147 = por %p145, %p146
      %p148 = scmp.ne.s32.totalorder %s140, %s142
      %p149 = scmp.eq.s32.totalorder %s22, 2
      %p150 = por %p148, %p149
      %p151 = scmp.ne.s32.totalorder %s142, %s143
      %p152 = scmp.eq.s32.totalorder %s22, 0
      %p153 = por %p151, %p152
      %p154 = scmp.ne.s32.totalorder %s142, %s143
      %p155 = scmp.eq.s32.totalorder %s23, 2
      %p156 = por %p154, %p155
      %p158 = scmp.ne.s32.totalorder %s143, %s157
      %p159 = scmp.eq.s32.totalorder %s23, 0
      %p160 = por %p158, %p159
      %s162 = sadd.s32 %s161, 1
      %p165 = scmp.eq.s32.totalorder %s17, 2
      %p166 = scmp.ne.s32.totalorder %s161, %s163
      %p167 = scmp.eq.s32.totalorder %s17, 0
      %p168 = por %p166, %p167
      %p169 = scmp.ne.s32.totalorder %s161, %s163
      %p170 = scmp.eq.s32.totalorder %s22, 2
      %p171 = por %p169, %p170
      %p172 = scmp.ne.s32.totalorder %s163, %s164
      %p173 = scmp.eq.s32.totalorder %s22, 0
      %p174 = por %p172, %p173
      %p175 = scmp.ne.s32.totalorder %s163, %s164
      %p176 = scmp.eq.s32.totalorder %s23, 2
      %p177 = por %p175, %p176
      %p179 = scmp.ne.s32.totalorder %s164, %s178
      %p180 = scmp.eq.s32.totalorder %s23, 0
      %p181 = por %p179, %p180
      %s183 = sadd.s32 %s182, 1
      %p186 = scmp.eq.s32.totalorder %s17, 2
      %p187 = scmp.ne.s32.totalorder %s182, %s184
      %p188 = scmp.eq.s32.totalorder %s17, 0
      %p189 = por %p187, %p188
      %p190 = scmp.ne.s32.totalorder %s182, %s184
      %p191 = scmp.eq.s32.totalorder %s22, 2
      %p192 = por %p190, %p191
      %p193 = scmp.ne.s32.totalorder %s184, %s185
      %p194 = scmp.eq.s32.totalorder %s22, 0
      %p195 = por %p193, %p194
      %p196 = scmp.ne.s32.totalorder %s184, %s185
      %p197 = scmp.eq.s32.totalorder %s23, 2
      %p198 = por %p196, %p197
      %p200 = scmp.ne.s32.totalorder %s185, %s199
      %p201 = scmp.eq.s32.totalorder %s23, 0
      %p202 = por %p200, %p201
      %s203 = ssub.s32 %s17, %s24
      %p204 = scmp.eq.s32.totalorder %s203, 0
      %s206 = sadd.s32 %s205, 1
      %s207 = scalar_select %p204, %s205, %s206
      %p210 = pneg %p204
      %p211 = scmp.eq.s32.totalorder %s17, 2
      %p212 = por %p210, %p211
      %p213 = scmp.ne.s32.totalorder %s205, %s208
      %p214 = scmp.eq.s32.totalorder %s17, 0
      %p215 = por %p213, %p214
      %p216 = scmp.ne.s32.totalorder %s205, %s208
      %p217 = scmp.eq.s32.totalorder %s22, 2
      %p218 = por %p216, %p217
      %p219 = scmp.ne.s32.totalorder %s208, %s209
      %p220 = scmp.eq.s32.totalorder %s22, 0
      %p221 = por %p219, %p220
      %p222 = scmp.ne.s32.totalorder %s208, %s209
      %p223 = scmp.eq.s32.totalorder %s23, 2
      %p224 = por %p222, %p223
      %p226 = scmp.ne.s32.totalorder %s209, %s225
      %p227 = scmp.eq.s32.totalorder %s23, 0
      %p228 = por %p226, %p227
      %p229 = scmp.le.s32.totalorder 1, %s17
      %p230 = scmp.lt.s32.totalorder %s17, 4
      %p231 = pnand %p229, %p230
      %p232 = pneg %p231
      // Predicated region
      $region9: #{tpu_custom_call.1} parent=5 // pred_check
        _
      $region10: #{tpu_custom_call.1} parent=5 // pred_check_branch
        %234 = sbr.rel (%p231) target = $region12
      $region11: #{tpu_custom_call.1} parent=5 // pred_region
        %s235 = ssub.s32 %s17, 1
        // Predicated region
        $region13: #{tpu_custom_call.1} parent=11 // pred_check
          %p236 = pneg %p90
        $region14: #{tpu_custom_call.1} parent=11 // pred_check_branch
          %238 = sbr.rel (%p236) target = $region16
        $region15: #{tpu_custom_call.1} parent=11 // pred_region
          _
        $region16: #{tpu_custom_call.1} parent=11 // pred_fallthru
          _
        // Predicated region
        $region17: #{tpu_custom_call.1} parent=11 // pred_check
          %p239 = pneg %p111
        $region18: #{tpu_custom_call.1} parent=11 // pred_check_branch
          %241 = sbr.rel (%p239) target = $region20
        $region19: #{tpu_custom_call.1} parent=11 // pred_region
          _
        $region20: #{tpu_custom_call.1} parent=11 // pred_fallthru
          _
        // Predicated region
        $region21: #{tpu_custom_call.1} parent=11 // pred_check
          %p242 = pneg %p132
        $region22: #{tpu_custom_call.1} parent=11 // pred_check_branch
          %244 = sbr.rel (%p242) target = $region24
        $region23: #{tpu_custom_call.1} parent=11 // pred_region
          _
        $region24: #{tpu_custom_call.1} parent=11 // pred_fallthru
          _
        // Predicated region
        $region25: #{tpu_custom_call.1} parent=11 // pred_check
          %p245 = pneg %p153
        $region26: #{tpu_custom_call.1} parent=11 // pred_check_branch
          %247 = sbr.rel (%p245) target = $region28
        $region27: #{tpu_custom_call.1} parent=11 // pred_region
          _
        $region28: #{tpu_custom_call.1} parent=11 // pred_fallthru
          _
        // Predicated region
        $region29: #{tpu_custom_call.1} parent=11 // pred_check
          %p248 = pneg %p174
        $region30: #{tpu_custom_call.1} parent=11 // pred_check_branch
          %250 = sbr.rel (%p248) target = $region32
        $region31: #{tpu_custom_call.1} parent=11 // pred_region
          _
        $region32: #{tpu_custom_call.1} parent=11 // pred_fallthru
          _
        // Predicated region
        $region33: #{tpu_custom_call.1} parent=11 // pred_check
          %p251 = pneg %p195
        $region34: #{tpu_custom_call.1} parent=11 // pred_check_branch
          %253 = sbr.rel (%p251) target = $region36
        $region35: #{tpu_custom_call.1} parent=11 // pred_region
          _
        $region36: #{tpu_custom_call.1} parent=11 // pred_fallthru
          _
      $region12: #{tpu_custom_call.1} parent=5 // pred_fallthru
        _
      %p254 = scmp.lt.s32.totalorder %s17, 3
      // Predicated region
      $region37: #{tpu_custom_call.1} parent=5 // pred_check
        %p255 = pneg %p254
      $region38: #{tpu_custom_call.1} parent=5 // pred_check_branch
        %257 = sbr.rel (%p255) target = $region40
      $region39: #{tpu_custom_call.1} parent=5 // pred_region
        // Predicated region
        $region41: #{tpu_custom_call.1} parent=39 // pred_check
          %p258 = pneg %p37
        $region42: #{tpu_custom_call.1} parent=39 // pred_check_branch
          %260 = sbr.rel (%p258) target = $region44
        $region43: #{tpu_custom_call.1} parent=39 // pred_region
          %p261 = scmp.lt.s32.totalorder %s17, 2
          %s262 = scalar_select %p261, %s17, 2
          %s263 = smul.addr %s262, 8
          %s264 = scalar_lea.vmem %s0, %s263
        $region44: #{tpu_custom_call.1} parent=39 // pred_fallthru
          _
        // Predicated region
        $region45: #{tpu_custom_call.1} parent=39 // pred_check
          %p265 = pneg %p63
        $region46: #{tpu_custom_call.1} parent=39 // pred_check_branch
          %267 = sbr.rel (%p265) target = $region48
        $region47: #{tpu_custom_call.1} parent=39 // pred_region
          %s268 = sand.u32 %s53, 1
          %s269 = sand.u32 %s53, 1
          %s270 = smul.addr %s269, 16
          %s271 = scalar_lea.vmem [#allocation2], %s270
          %s272 = smul.addr %s17, 8
          %s273 = scalar_lea.vmem %s1, %s272
          // Predicated region
          $region49: #{tpu_custom_call.1} parent=47 // pred_check
            _
          $region50: #{tpu_custom_call.1} parent=47 // pred_check_branch
            %275 = sbr.rel (0) target = $region52
          $region51: #{tpu_custom_call.1} parent=47 // pred_region
            // Predicated region
            $region53: #{tpu_custom_call.1} parent=51 // pred_check
              _
            $region54: #{tpu_custom_call.1} parent=51 // pred_check_branch
              %277 = sbr.rel (0) target = $region56
            $region55: #{tpu_custom_call.1} parent=51 // pred_region
              // Predicated region
              $region68: #{tpu_custom_call.1} parent=55 // pred_check
                _
              $region69: #{tpu_custom_call.1} parent=55 // pred_check_branch
                %295 = sbr.rel (0) target = $region71
              $region70: #{tpu_custom_call.1} parent=55 // pred_region
                loop: start=0, step=1, limit=1
                $region72: #{tpu_custom_call.1} parent=70 // loop_pre_header
                  _
                $region73: #{tpu_custom_call.1} parent=70 // loop_header
                  %s297 = sphi 0, %s301
                  %p298 = scmp.ge.s32.totalorder %s297, 1
                  %s302 = sphi %s273, %s273
                  %s303 = sphi %s271, %s271
                $region74: #{tpu_custom_call.1} parent=70 // loop_header_branch
                  %300 = sbr.rel (%p298) target = $region78
                $region75: #{tpu_custom_call.1} parent=70 // loop_body
                  %v304 = vld [vmem:[%s302] sm:$0xff]
                  %305 = vst [vmem:[%s303] sm:$0xff] %v304
                  %v306 = vld [vmem:[%s302 + $0x18] sm:$0xff]
                  %307 = vst [vmem:[%s303 + $0x8] sm:$0xff] %v306
                $region76: #{tpu_custom_call.1} parent=70 // loop_footer
                  %s301 = sadd.s32 1, %s297
                $region77: #{tpu_custom_call.1} parent=70 // loop_footer_branch
                  %296 = sbr.rel target = $region73
                $region78: #{tpu_custom_call.1} parent=70 // loop_exit
                  _
              $region71: #{tpu_custom_call.1} parent=55 // pred_fallthru
                _
              // Predicated region
              $region79: #{tpu_custom_call.1} parent=55 // pred_check
                _
              $region80: #{tpu_custom_call.1} parent=55 // pred_check_branch
                %309 = sbr.rel target = $region82
              $region81: #{tpu_custom_call.1} parent=55 // pred_region
                _
              $region82: #{tpu_custom_call.1} parent=55 // pred_fallthru
                _
            $region56: #{tpu_custom_call.1} parent=51 // pred_fallthru
              _
            // Predicated region
            $region57: #{tpu_custom_call.1} parent=51 // pred_check
              _
            $region58: #{tpu_custom_call.1} parent=51 // pred_check_branch
              %279 = sbr.rel target = $region60
            $region59: #{tpu_custom_call.1} parent=51 // pred_region
              %s281 = ssub.s32 256, 1
              loop: start=0, step=1, limit=1
              $region61: #{tpu_custom_call.1} parent=59 // loop_pre_header
                _
              $region62: #{tpu_custom_call.1} parent=59 // loop_header
                %s283 = sphi 0, %s287
                %p284 = scmp.ge.s32.totalorder %s283, 1
                %s288 = sphi %s273, %s273
                %s289 = sphi %s271, %s271
              $region63: #{tpu_custom_call.1} parent=59 // loop_header_branch
                %286 = sbr.rel (%p284) target = $region67
              $region64: #{tpu_custom_call.1} parent=59 // loop_body
                %v290 = vld [vmem:[%s288] sm:%s281]
                %291 = vst [vmem:[%s289] sm:%s281] %v290
                %v292 = vld [vmem:[%s288 + $0x18] sm:%s281]
                %293 = vst [vmem:[%s289 + $0x8] sm:%s281] %v292
              $region65: #{tpu_custom_call.1} parent=59 // loop_footer
                %s287 = sadd.s32 1, %s283
              $region66: #{tpu_custom_call.1} parent=59 // loop_footer_branch
                %282 = sbr.rel target = $region62
              $region67: #{tpu_custom_call.1} parent=59 // loop_exit
                _
            $region60: #{tpu_custom_call.1} parent=51 // pred_fallthru
              _
          $region52: #{tpu_custom_call.1} parent=47 // pred_fallthru
            _
          %310 = vnop
        $region48: #{tpu_custom_call.1} parent=39 // pred_fallthru
          _
      $region40: #{tpu_custom_call.1} parent=5 // pred_fallthru
        _
      %p311 = scmp.le.s32.totalorder 1, %s17
      %p312 = scmp.lt.s32.totalorder %s17, 4
      %p313 = pnand %p311, %p312
      %p314 = pneg %p313
      // Predicated region
      $region83: #{tpu_custom_call.1} parent=5 // pred_check
        _
      $region84: #{tpu_custom_call.1} parent=5 // pred_check_branch
        %316 = sbr.rel (%p313) target = $region86
      $region85: #{tpu_custom_call.1} parent=5 // pred_region
        %s317 = ssub.s32 %s17, 1
        %s318 = sand.u32 %s56, 1
        %s319 = sand.u32 %s56, 1
        %s320 = smul.addr %s319, 16
        %s321 = scalar_lea.vmem [#allocation2], %s320
        // Predicated region
        $region87: #{tpu_custom_call.1} parent=85 // pred_check
          %p322 = pneg %p69
        $region88: #{tpu_custom_call.1} parent=85 // pred_check_branch
          %324 = sbr.rel (%p322) target = $region90
        $region89: #{tpu_custom_call.1} parent=85 // pred_region
          _
        $region90: #{tpu_custom_call.1} parent=85 // pred_fallthru
          _
        %p325 = scmp.lt.s32.totalorder %s22, 2
        %s326 = scalar_select %p325, %s22, 2
        %s327 = smul.addr %s326, 8
        %s328 = scalar_lea.vmem %s0, %s327
        %p329 = pneg %p43
        %p330 = pneg %p40
        %s331 = sand.u32 %s56, 1
        %s332 = sand.u32 %s56, 1
        %s333 = smul.addr %s332, 16
        %s334 = scalar_lea.vmem [#allocation2], %s333
        %p335 = pneg %p69
        %p336 = pneg %p66
        %p337 = pneg %p90
        %p338 = pneg %p87
        %p339 = pneg %p111
        %p340 = pneg %p108
        %p341 = pneg %p132
        %p342 = pneg %p129
        %p343 = pneg %p153
        %p344 = pneg %p150
        %p345 = pneg %p174
        %p346 = pneg %p171
        %p347 = pneg %p195
        %p348 = pneg %p192
        %p349 = pneg %p221
        %p350 = pneg %p218
        %s351 = sand.u32 %s208, 1
        %s352 = scalar_lea.sflag [#allocation4], %s351
        %s353 = sand.u32 %s208, 1
        %s354 = smul.addr %s353, 32
        %s355 = scalar_lea.vmem [#allocation3], %s354
        %p356 = scmp.lt.s32.totalorder %s22, 2
        %s357 = scalar_select %p356, %s22, 2
        %s358 = smul.addr %s357, 8
        %s359 = scalar_lea.vmem %s0, %s358
        %v360 = vld [vmem:[%s359] sm:$0xff]
        %v361 = vld [vmem:[%s2] sm:$0xff]
        %v362 = vld [vmem:[%s2 + $0x8] sm:$0xff]
        %v363 = vld [vmem:[%s3] sm:$0xff]
        %v364 = vld [vmem:[%s3 + $0x8] sm:$0xff]
        %366 = vset.pattern.permute.xlu0 0
        %367 = vperm.xlu0 %366, %v363
        %v368 = vpop.permute.xlu0 %367
        %371 = vset.pattern.permute.xlu0 0
        %372 = vperm.xlu0 %371, %v364
        %v373 = vpop.permute.xlu0 %372
        %vm375 = vcmask 64512
        %v377 = vsel %vm375, %v361, 0
        %v380 = vsel %vm375, %v362, 0
        %382 = vmatpush.msra.mxu0 0.0
        %383 = vmatpush.msra.mxu0 0.0
        %384 = vmatpush.msra.mxu0 0.0
        %385 = vmatpush.msra.mxu0 0.0
        %386 = vmatpush.msra.mxu0 0.0
        %387 = vmatpush.msra.mxu0 0.0
        %388 = vmatpush.msra.mxu0 0.0
        %389 = vmatpush.msra.mxu0 0.0
        %390 = vmatpush.msra.mxu0 0.0
        %391 = vmatpush.msra.mxu0 0.0
        %392 = vmatpush.msra.mxu0 0.0
        %393 = vmatpush.msra.mxu0 0.0
        %394 = vmatpush.msra.mxu0 0.0
        %395 = vmatpush.msra.mxu0 0.0
        %396 = vmatpush.msra.mxu0 0.0
        %397 = vmatpush.msra.mxu0 %v360
        %398 = vmatmul.f32.gmra.mxu0 %v377
        %v399 = vpop.f32.mrf.mxu0
        %v400 = vadd.f32 %v368, %v399
        %401 = vmatmul.f32.gmra.mxu0 %v380
        %v402 = vpop.f32.mrf.mxu0
        %v403 = vadd.f32 %v373, %v402
        %404 = vdwg.mxu0
        %v405 = vmax.f32 %v400, 0.0
        %v406 = vmax.f32 %v403, 0.0
        %v407 = vld [vmem:[%s4] sm:$0xff]
        %v408 = vld [vmem:[%s5] sm:$0xff]
        %410 = vset.pattern.permute.xlu0 0
        %411 = vperm.xlu0 %410, %v408
        %v412 = vpop.permute.xlu0 %411
        %vm414 = vcmask 130048
        %v416 = vsel %vm414, %v407, 0
        %418 = vmatpush.msra.mxu0 0.0
        %419 = vmatpush.msra.mxu0 0.0
        %420 = vmatpush.msra.mxu0 0.0
        %421 = vmatpush.msra.mxu0 0.0
        %422 = vmatpush.msra.mxu0 0.0
        %423 = vmatpush.msra.mxu0 0.0
        %424 = vmatpush.msra.mxu0 0.0
        %425 = vmatpush.msra.mxu0 0.0
        %426 = vmatpush.msra.mxu0 0.0
        %427 = vmatpush.msra.mxu0 0.0
        %428 = vmatpush.msra.mxu0 0.0
        %429 = vmatpush.msra.mxu0 0.0
        %430 = vmatpush.msra.mxu0 0.0
        %431 = vmatpush.msra.mxu0 0.0
        %432 = vmatpush.msra.mxu0 %v406
        %433 = vmatpush.msra.mxu0 %v405
        %434 = vmatmul.f32.gmra.mxu0 %v416
        %v435 = vpop.f32.mrf.mxu0
        %v436 = vadd.f32 %v412, %v435
        %437 = vdwg.mxu0
        %v438 = vmax.f32 %v436, 0.0
        %v439 = vld [vmem:[%s6] sm:$0xff]
        %v440 = vld [vmem:[%s6 + $0x8] sm:$0xff]
        %v441 = vld [vmem:[%s6 + $0x10] sm:$0xff]
        %v442 = vld [vmem:[%s321] sm:$0xff]
        %v443 = vld [vmem:[%s321 + $0x8] sm:$0xff]
        %v444 = vld [vmem:[%s7] sm:$0xff]
        %v445 = vld [vmem:[%s7 + $0x8] sm:$0xff]
        %v446 = vld [vmem:[%s7 + $0x10] sm:$0xff]
        %448 = vset.pattern.permute.xlu0 0
        %449 = vperm.xlu0 %448, %v444
        %v450 = vpop.permute.xlu0 %449
        %453 = vset.pattern.permute.xlu0 0
        %454 = vperm.xlu0 %453, %v445
        %v455 = vpop.permute.xlu0 %454
        %458 = vset.pattern.permute.xlu0 0
        %459 = vperm.xlu0 %458, %v446
        %v460 = vpop.permute.xlu0 %459
        %v463 = vsel %vm414, %v439, 0
        %v466 = vsel %vm414, %v440, 0
        %v469 = vsel %vm414, %v441, 0
        %471 = vmatpush.msra.mxu0 0.0
        %472 = vmatpush.msra.mxu0 0.0
        %473 = vmatpush.msra.mxu0 0.0
        %474 = vmatpush.msra.mxu0 0.0
        %475 = vmatpush.msra.mxu0 0.0
        %476 = vmatpush.msra.mxu0 0.0
        %477 = vmatpush.msra.mxu0 0.0
        %478 = vmatpush.msra.mxu0 0.0
        %479 = vmatpush.msra.mxu0 0.0
        %480 = vmatpush.msra.mxu0 0.0
        %481 = vmatpush.msra.mxu0 0.0
        %482 = vmatpush.msra.mxu0 0.0
        %483 = vmatpush.msra.mxu0 0.0
        %484 = vmatpush.msra.mxu0 0.0
        %485 = vmatpush.msra.mxu0 %v443
        %486 = vmatpush.msra.mxu0 %v442
        %487 = vmatmul.f32.gmra.mxu0 %v463
        %v488 = vpop.f32.mrf.mxu0
        %v489 = vadd.f32 %v450, %v488
        %490 = vmatmul.f32.gmra.mxu0 %v466
        %v491 = vpop.f32.mrf.mxu0
        %v492 = vadd.f32 %v455, %v491
        %493 = vmatmul.f32.gmra.mxu0 %v469
        %v494 = vpop.f32.mrf.mxu0
        %v495 = vadd.f32 %v460, %v494
        %496 = vdwg.mxu0
        %497 = vst [vmem:[%s355] sm:$0xff] %v489
        %498 = vst [vmem:[%s355 + $0x8] sm:$0xff] %v492
        %499 = vst [vmem:[%s355 + $0x10] sm:$0xff] %v495
        %500 = vst [vmem:[%s355 + $0x18] sm:$0xff] %v438
        %s501 = sand.u32 %s208, 1
        %s502 = scalar_lea.sflag [#allocation4], %s501
        %s503 = sand.u32 %s208, 1
        %s504 = smul.addr %s503, 32
        %s505 = scalar_lea.vmem [#allocation3], %s504
        // Predicated region
        $region91: #{tpu_custom_call.1} parent=85 // pred_check
          %p506 = pneg %p218
        $region92: #{tpu_custom_call.1} parent=85 // pred_check_branch
          %508 = sbr.rel (%p506) target = $region94
        $region93: #{tpu_custom_call.1} parent=85 // pred_region
          %510 = vsyncadd %s502, 0
          %s511 = smul.addr %s22, 8
          %s512 = scalar_lea.hbm %s8, %s511
          %s513 = sshll.u32 %s505, 4
          %s514 = int_to_ptr.vmem [resolvable:$true] %s513
          %s515 = sshll.u32 %s512, 4
          %s516 = int_to_ptr.hbm [resolvable:$true] %s515
          %521 = dma.vmem_to_hbm [thread:$0]  %s514, 512, %s516, %s502, 128, 384, 8
        $region94: #{tpu_custom_call.1} parent=85 // pred_fallthru
          _
      $region86: #{tpu_custom_call.1} parent=5 // pred_fallthru
        _
      %p522 = scmp.le.s32.totalorder 2, %s17
      // Predicated region
      $region95: #{tpu_custom_call.1} parent=5 // pred_check
        %p523 = pneg %p522
      $region96: #{tpu_custom_call.1} parent=5 // pred_check_branch
        %525 = sbr.rel (%p523) target = $region98
      $region97: #{tpu_custom_call.1} parent=5 // pred_region
        %s526 = ssub.s32 %s17, 2
        // Predicated region
        $region99: #{tpu_custom_call.1} parent=97 // pred_check
          %p527 = pneg %p224
        $region100: #{tpu_custom_call.1} parent=97 // pred_check_branch
          %529 = sbr.rel (%p527) target = $region102
        $region101: #{tpu_custom_call.1} parent=97 // pred_region
          %s530 = sand.u32 %s209, 1
          %s531 = scalar_lea.sflag [#allocation4], %s530
          %s532 = sand.u32 %s209, 1
          %s533 = smul.addr %s532, 32
          %s534 = scalar_lea.vmem [#allocation3], %s533
          %536 = dma.done %s531, 512
        $region102: #{tpu_custom_call.1} parent=97 // pred_fallthru
          _
      $region98: #{tpu_custom_call.1} parent=5 // pred_fallthru
        _
    $region6: #{tpu_custom_call.1} parent=1 // loop_footer
      %s21 = sadd.s32 1, %s17
    $region7: #{tpu_custom_call.1} parent=1 // loop_footer_branch
      %16 = sbr.rel target = $region3
    $region8: #{tpu_custom_call.1} parent=1 // loop_exit
      _
    %537 = vsyncpa [#allocation4], 1
    %s538 = scalar_lea.sflag [#allocation4], 1
    %539 = vsyncpa %s538, 1

</llo_original>
